<compile_context>
chip_gen: v7x
topology: tpu7x:2x2x1
jax: 0.10.0
libtpu: 0.0.40
codegen_flags: <defaults>
</compile_context>

<pallas_src>
import functools

import jax
import jax.numpy as jnp
from jax.experimental import pallas as pl
from jax.experimental.pallas import tpu as pltpu


def _attention_kernel(x_ref, wq_ref, bq_ref, wk_ref, bk_ref, wv_ref, bv_ref,
                      wp_ref, bp_ref, o_ref, k_cache, v_cache, acc_ref, *, q_tile):
    qi = pl.program_id(1)
    h = pl.program_id(2)

    # --- Cache this head's K/V over the full sequence on the first q-tile. ---
    @pl.when(qi == 0)
    def _():
        x_all = x_ref[...]                                                 # (N, C)
        k = jnp.dot(x_all, wk_ref[h], preferred_element_type=jnp.float32) + bk_ref[h]
        v = jnp.dot(x_all, wv_ref[h], preferred_element_type=jnp.float32) + bv_ref[h]
        k_cache[h] = k.astype(k_cache.dtype)
        v_cache[h] = v.astype(v_cache.dtype)

    # --- Init the per-q-tile output-projection accumulator on the first head. ---
    @pl.when(h == 0)
    def _():
        acc_ref[...] = jnp.zeros_like(acc_ref)

    # --- Q projection for this q-tile (softmax scale already folded into Wq/bq). ---
    q_start = pl.multiple_of(qi * q_tile, q_tile)
    xq = x_ref[pl.ds(q_start, q_tile), :]                                  # (tq, C)
    q = jnp.dot(xq, wq_ref[h], preferred_element_type=jnp.float32) + bq_ref[h]  # (tq, hd)

    k = k_cache[h]                                                         # (N, hd)
    v = v_cache[h]                                                         # (N, hd)

    # scores = q @ k^T via dot_general -- no materialized transpose of K.
    scores = jax.lax.dot_general(
        q.astype(k.dtype), k, (((1,), (1,)), ((), ())),
        preferred_element_type=jnp.float32)                                # (tq, N)

    # Softmax (f32 math), normalization deferred to after the PV matmul.
    m = jnp.max(scores, axis=-1, keepdims=True)
    p = jnp.exp(scores - m)
    s = jnp.sum(p, axis=-1, keepdims=True)
    inv = pl.reciprocal(s, approx=True)        # EUP slot
    inv = inv * (2.0 - s * inv)                # one Newton step -> ~f32-exact

    head_out = jnp.dot(p.astype(v.dtype), v,
                       preferred_element_type=jnp.float32) * inv           # (tq, hd)

    # Fold the output projection per head: acc += head_out @ W_proj[h*hd:(h+1)*hd, :]
    acc_ref[...] += jnp.dot(head_out.astype(wp_ref.dtype), wp_ref[h],
                            preferred_element_type=jnp.float32)            # (tq, C)

    # --- Finalize: add bias and store once, on the last head. ---
    @pl.when(h == pl.num_programs(2) - 1)
    def _():
        o_ref[...] = (acc_ref[...] + bp_ref[0]).astype(o_ref.dtype)


def attention_pallas(x, w_qkv, b_qkv, w_proj, b_proj, *, num_heads,
                     q_tile=None, vmem_limit_bytes=None):
    B, N, C = x.shape
    assert C % num_heads == 0, "C must be divisible by num_heads"
    hd = C // num_heads
    scale = hd ** (-0.5)

    b_qkv = jnp.reshape(b_qkv, (3 * C,))
    b_proj = jnp.reshape(b_proj, (C,))

    # Pre-reshape weights into lane-dense per-head slabs (one-time, outside kernel).
    # torch layout of the fused qkv output: index = s*C + h*hd + d, s in {q,k,v}.
    def head_slab(w_cols, b_cols):
        w = w_cols.reshape(C, num_heads, hd).transpose(1, 0, 2)            # (H, C, hd)
        b = b_cols.reshape(num_heads, 1, hd)                               # (H, 1, hd)
        return w, b

    w_q, b_q = head_slab(w_qkv[:, 0 * C:1 * C], b_qkv[0 * C:1 * C])
    w_k, b_k = head_slab(w_qkv[:, 1 * C:2 * C], b_qkv[1 * C:2 * C])
    w_v, b_v = head_slab(w_qkv[:, 2 * C:3 * C], b_qkv[2 * C:3 * C])

    # Fold the softmax scale into the Q projection (zero in-kernel cost).
    w_q = (w_q * scale).astype(w_qkv.dtype)
    b_q = (b_q * scale).astype(w_qkv.dtype)

    w_p = w_proj.reshape(num_heads, hd, C)                                 # (H, hd, C)
    b_p = b_proj.reshape(1, 1, C)

    # q-tile: multiple of 8 sublanes (or the full N). For v7x halve relative to v6e
    # and pass vmem_limit_bytes explicitly if tiles are large.
    if q_tile is None:
        q_tile = N
        for t in (512, 256, 128):
            if N > t and N % t == 0:
                q_tile = t
                break
    assert N % q_tile == 0, "q_tile must divide N"
    n_q = N // q_tile

    kernel = functools.partial(_attention_kernel, q_tile=q_tile)

    grid_spec = pltpu.PrefetchScalarGridSpec(
        num_scalar_prefetch=0,
        grid=(B, n_q, num_heads),
        in_specs=[
            # x: full sequence resident per batch (K/V need every row).
            pl.BlockSpec((None, N, C), lambda b, qi, h: (b, 0, 0)),
            # Per-head weight slabs: constant index_map -> DMA'd once, VMEM-resident.
            pl.BlockSpec((num_heads, C, hd), lambda b, qi, h: (0, 0, 0)),  # W_q (scaled)
            pl.BlockSpec((num_heads, 1, hd), lambda b, qi, h: (0, 0, 0)),  # b_q (scaled)
            pl.BlockSpec((num_heads, C, hd), lambda b, qi, h: (0, 0, 0)),  # W_k
            pl.BlockSpec((num_heads, 1, hd), lambda b, qi, h: (0, 0, 0)),  # b_k
            pl.BlockSpec((num_heads, C, hd), lambda b, qi, h: (0, 0, 0)),  # W_v
            pl.BlockSpec((num_heads, 1, hd), lambda b, qi, h: (0, 0, 0)),  # b_v
            pl.BlockSpec((num_heads, hd, C), lambda b, qi, h: (0, 0, 0)),  # W_proj rows
            pl.BlockSpec((1, 1, C), lambda b, qi, h: (0, 0, 0)),           # b_proj
        ],
        out_specs=pl.BlockSpec((None, q_tile, C), lambda b, qi, h: (b, qi, 0)),
        scratch_shapes=[
            pltpu.VMEM((num_heads, N, hd), x.dtype),     # K cache (per batch, per head)
            pltpu.VMEM((num_heads, N, hd), x.dtype),     # V cache
            pltpu.VMEM((q_tile, C), jnp.float32),        # output-projection accumulator
        ],
    )

    return pl.pallas_call(
        kernel,
        out_shape=jax.ShapeDtypeStruct((B, N, C), x.dtype),
        grid_spec=grid_spec,
        compiler_params=pltpu.CompilerParams(
            # batch is independent (megacore / dual-TC); q-tile and head are
            # sequential (K/V cache reuse + per-head output accumulation).
            dimension_semantics=("parallel", "arbitrary", "arbitrary"),
            vmem_limit_bytes=vmem_limit_bytes,
        ),
    )(x, w_q, b_q, w_k, b_k, w_v, b_v, w_p, b_p)


def attention_ref(x, w_qkv, b_qkv, w_proj, b_proj, *, num_heads):
    # Pure-JAX reference mirroring the PyTorch forward exactly.
    B, N, C = x.shape
    hd = C // num_heads
    scale = hd ** (-0.5)
    qkv = x @ w_qkv + b_qkv                                    # (B, N, 3C)
    qkv = qkv.reshape(B, N, 3, num_heads, hd).transpose(2, 0, 3, 1, 4)
    q, k, v = qkv[0], qkv[1], qkv[2]                           # (B, H, N, hd)
    attn = (q @ jnp.swapaxes(k, -2, -1)) * scale
    attn = jax.nn.softmax(attn, axis=-1)
    out = (attn @ v).transpose(0, 2, 1, 3).reshape(B, N, C)
    return out @ w_proj + b_proj


if __name__ == "__main__":
    B, N, C = 2, 8, 32
    num_heads = 4

    key = jax.random.PRNGKey(0)
    kx, k1, k2, k3, k4 = jax.random.split(key, 5)

    x = jax.random.normal(kx, (B, N, C), dtype=jnp.float32)
    # nn.Linear(dim, dim*3) / nn.Linear(dim, dim), stored (in, out).
    w_qkv = jax.random.normal(k1, (C, 3 * C), dtype=jnp.float32) * 0.1
    b_qkv = jax.random.normal(k2, (3 * C,), dtype=jnp.float32) * 0.1
    w_proj = jax.random.normal(k3, (C, C), dtype=jnp.float32) * 0.1
    b_proj = jax.random.normal(k4, (C,), dtype=jnp.float32) * 0.1

    out = attention_pallas(x, w_qkv, b_qkv, w_proj, b_proj, num_heads=num_heads)
    out = jax.block_until_ready(out)

    ref = attention_ref(x, w_qkv, b_qkv, w_proj, b_proj, num_heads=num_heads)
    assert out.shape == (B, N, C)
    assert jnp.allclose(out, ref, atol=1e-3, rtol=1e-3), "mismatch vs reference"

    print("KERNEL_OK")
</pallas_src>

<mosaic_0001>
module attributes {stable_mosaic.version = 11 : i64} {
  func.func @_attention_kernel(%arg0: i32, %arg1: i32, %arg2: i32, %arg3: memref<1x8x32xf32, #tpu.memory_space<vmem>>, %arg4: memref<4x32x8xf32, #tpu.memory_space<vmem>>, %arg5: memref<4x1x8xf32, #tpu.memory_space<vmem>>, %arg6: memref<4x32x8xf32, #tpu.memory_space<vmem>>, %arg7: memref<4x1x8xf32, #tpu.memory_space<vmem>>, %arg8: memref<4x32x8xf32, #tpu.memory_space<vmem>>, %arg9: memref<4x1x8xf32, #tpu.memory_space<vmem>>, %arg10: memref<4x8x32xf32, #tpu.memory_space<vmem>>, %arg11: memref<1x1x32xf32, #tpu.memory_space<vmem>>, %arg12: memref<1x8x32xf32, #tpu.memory_space<vmem>>, %arg13: memref<4x8x8xf32, #tpu.memory_space<vmem>>, %arg14: memref<4x8x8xf32, #tpu.memory_space<vmem>>, %arg15: memref<8x32xf32, #tpu.memory_space<vmem>>) attributes {dimension_semantics = [#tpu.dimension_semantics<parallel>, #tpu.dimension_semantics<arbitrary>, #tpu.dimension_semantics<arbitrary>], iteration_bounds = array<i64: 2, 1, 4>, scalar_prefetch = 0 : i64, scratch_operands = 3 : i64, tpu.core_type = #tpu.core_type<tc>, window_params = [{transform_indices = @transform_0, window_bounds = array<i64: 1, 8, 32>}, {pipeline_mode = #tpu.pipeline_mode<synchronous>, transform_indices = @transform_1, window_bounds = array<i64: 4, 32, 8>}, {pipeline_mode = #tpu.pipeline_mode<synchronous>, transform_indices = @transform_2, window_bounds = array<i64: 4, 1, 8>}, {pipeline_mode = #tpu.pipeline_mode<synchronous>, transform_indices = @transform_3, window_bounds = array<i64: 4, 32, 8>}, {pipeline_mode = #tpu.pipeline_mode<synchronous>, transform_indices = @transform_4, window_bounds = array<i64: 4, 1, 8>}, {pipeline_mode = #tpu.pipeline_mode<synchronous>, transform_indices = @transform_5, window_bounds = array<i64: 4, 32, 8>}, {pipeline_mode = #tpu.pipeline_mode<synchronous>, transform_indices = @transform_6, window_bounds = array<i64: 4, 1, 8>}, {pipeline_mode = #tpu.pipeline_mode<synchronous>, transform_indices = @transform_7, window_bounds = array<i64: 4, 8, 32>}, {pipeline_mode = #tpu.pipeline_mode<synchronous>, transform_indices = @transform_8, window_bounds = array<i64: 1, 1, 32>}, {transform_indices = @transform_9, window_bounds = array<i64: 1, 8, 32>}]} {
    %c0_i32 = arith.constant 0 : i32
    %0 = arith.cmpi eq, %arg1, %c0_i32 : i32
    %1 = arith.extui %0 : i1 to i32
    %c0_i32_0 = arith.constant 0 : i32
    %2 = arith.cmpi ne, %1, %c0_i32_0 : i32
    scf.if %2 {
      %c0_25 = arith.constant 0 : index
      %c0_26 = arith.constant 0 : index
      %c0_27 = arith.constant 0 : index
      %52 = vector.load %arg3[%c0_25, %c0_26, %c0_27] : memref<1x8x32xf32, #tpu.memory_space<vmem>>, vector<1x8x32xf32>
      %53 = vector.shape_cast %52 : vector<1x8x32xf32> to vector<8x32xf32>
      %54 = arith.index_cast %arg2 : i32 to index
      %c0_28 = arith.constant 0 : index
      %c0_29 = arith.constant 0 : index
      %55 = vector.load %arg6[%54, %c0_28, %c0_29] : memref<4x32x8xf32, #tpu.memory_space<vmem>>, vector<1x32x8xf32>
      %56 = vector.shape_cast %55 : vector<1x32x8xf32> to vector<32x8xf32>
      %cst_30 = arith.constant dense<0.000000e+00> : vector<8x8xf32>
      %57 = tpu.matmul %53, %56, %cst_30 {dimension_numbers = #tpu.dot_dimension_numbers<[1], [0], [0], [1], [0, 0, 1, 1], [], []>} : vector<8x32xf32>, vector<32x8xf32>, vector<8x8xf32> -> vector<8x8xf32>
      %58 = arith.index_cast %arg2 : i32 to index
      %c0_31 = arith.constant 0 : index
      %c0_32 = arith.constant 0 : index
      %59 = vector.load %arg7[%58, %c0_31, %c0_32] : memref<4x1x8xf32, #tpu.memory_space<vmem>>, vector<1x1x8xf32>
      %60 = vector.shape_cast %59 : vector<1x1x8xf32> to vector<1x8xf32>
      %61 = vector.broadcast %60 : vector<1x8xf32> to vector<8x8xf32>
      %62 = arith.addf %57, %61 : vector<8x8xf32>
      %63 = arith.index_cast %arg2 : i32 to index
      %c0_33 = arith.constant 0 : index
      %c0_34 = arith.constant 0 : index
      %64 = vector.load %arg8[%63, %c0_33, %c0_34] : memref<4x32x8xf32, #tpu.memory_space<vmem>>, vector<1x32x8xf32>
      %65 = vector.shape_cast %64 : vector<1x32x8xf32> to vector<32x8xf32>
      %cst_35 = arith.constant dense<0.000000e+00> : vector<8x8xf32>
      %66 = tpu.matmul %53, %65, %cst_35 {dimension_numbers = #tpu.dot_dimension_numbers<[1], [0], [0], [1], [0, 0, 1, 1], [], []>} : vector<8x32xf32>, vector<32x8xf32>, vector<8x8xf32> -> vector<8x8xf32>
      %67 = arith.index_cast %arg2 : i32 to index
      %c0_36 = arith.constant 0 : index
      %c0_37 = arith.constant 0 : index
      %68 = vector.load %arg9[%67, %c0_36, %c0_37] : memref<4x1x8xf32, #tpu.memory_space<vmem>>, vector<1x1x8xf32>
      %69 = vector.shape_cast %68 : vector<1x1x8xf32> to vector<1x8xf32>
      %70 = vector.broadcast %69 : vector<1x8xf32> to vector<8x8xf32>
      %71 = arith.addf %66, %70 : vector<8x8xf32>
      %72 = arith.index_cast %arg2 : i32 to index
      %c0_38 = arith.constant 0 : index
      %c0_39 = arith.constant 0 : index
      %73 = vector.load %arg13[%72, %c0_38, %c0_39] : memref<4x8x8xf32, #tpu.memory_space<vmem>>, vector<1x8x8xf32>
      %74 = vector.shape_cast %73 : vector<1x8x8xf32> to vector<8x8xf32>
      %75 = vector.shape_cast %62 : vector<8x8xf32> to vector<1x8x8xf32>
      tpu.vector_store %arg13[%72, %c0_38, %c0_39], %75 {strides = array<i32>} : memref<4x8x8xf32, #tpu.memory_space<vmem>>, vector<1x8x8xf32>,
      %76 = arith.index_cast %arg2 : i32 to index
      %c0_40 = arith.constant 0 : index
      %c0_41 = arith.constant 0 : index
      %77 = vector.load %arg14[%76, %c0_40, %c0_41] : memref<4x8x8xf32, #tpu.memory_space<vmem>>, vector<1x8x8xf32>
      %78 = vector.shape_cast %77 : vector<1x8x8xf32> to vector<8x8xf32>
      %79 = vector.shape_cast %71 : vector<8x8xf32> to vector<1x8x8xf32>
      tpu.vector_store %arg14[%76, %c0_40, %c0_41], %79 {strides = array<i32>} : memref<4x8x8xf32, #tpu.memory_space<vmem>>, vector<1x8x8xf32>,
    } else {
    }
    %c0_i32_1 = arith.constant 0 : i32
    %3 = arith.cmpi eq, %arg2, %c0_i32_1 : i32
    %4 = arith.extui %3 : i1 to i32
    %c0_i32_2 = arith.constant 0 : i32
    %5 = arith.cmpi ne, %4, %c0_i32_2 : i32
    scf.if %5 {
      %cst_25 = arith.constant 0.000000e+00 : f32
      %52 = vector.broadcast %cst_25 : f32 to vector<8x32xf32>
      %c0_26 = arith.constant 0 : index
      %c0_27 = arith.constant 0 : index
      %53 = vector.load %arg15[%c0_26, %c0_27] : memref<8x32xf32, #tpu.memory_space<vmem>>, vector<8x32xf32>
      tpu.vector_store %arg15[%c0_26, %c0_27], %52 {strides = array<i32>} : memref<8x32xf32, #tpu.memory_space<vmem>>, vector<8x32xf32>,
    } else {
    }
    %c8_i32 = arith.constant 8 : i32
    %6 = arith.muli %arg1, %c8_i32 : i32
    %7 = tpu.assume_multiple %6, 8 : i32
    %c0 = arith.constant 0 : index
    %8 = arith.index_cast %7 : i32 to index
    %c0_3 = arith.constant 0 : index
    %9 = vector.load %arg3[%c0, %8, %c0_3] : memref<1x8x32xf32, #tpu.memory_space<vmem>>, vector<1x8x32xf32>
    %10 = vector.shape_cast %9 : vector<1x8x32xf32> to vector<8x32xf32>
    %11 = arith.index_cast %arg2 : i32 to index
    %c0_4 = arith.constant 0 : index
    %c0_5 = arith.constant 0 : index
    %12 = vector.load %arg4[%11, %c0_4, %c0_5] : memref<4x32x8xf32, #tpu.memory_space<vmem>>, vector<1x32x8xf32>
    %13 = vector.shape_cast %12 : vector<1x32x8xf32> to vector<32x8xf32>
    %cst = arith.constant dense<0.000000e+00> : vector<8x8xf32>
    %14 = tpu.matmul %10, %13, %cst {dimension_numbers = #tpu.dot_dimension_numbers<[1], [0], [0], [1], [0, 0, 1, 1], [], []>} : vector<8x32xf32>, vector<32x8xf32>, vector<8x8xf32> -> vector<8x8xf32>
    %15 = arith.index_cast %arg2 : i32 to index
    %c0_6 = arith.constant 0 : index
    %c0_7 = arith.constant 0 : index
    %16 = vector.load %arg5[%15, %c0_6, %c0_7] : memref<4x1x8xf32, #tpu.memory_space<vmem>>, vector<1x1x8xf32>
    %17 = vector.shape_cast %16 : vector<1x1x8xf32> to vector<1x8xf32>
    %18 = vector.broadcast %17 : vector<1x8xf32> to vector<8x8xf32>
    %19 = arith.addf %14, %18 : vector<8x8xf32>
    %20 = arith.index_cast %arg2 : i32 to index
    %c0_8 = arith.constant 0 : index
    %c0_9 = arith.constant 0 : index
    %21 = vector.load %arg13[%20, %c0_8, %c0_9] : memref<4x8x8xf32, #tpu.memory_space<vmem>>, vector<1x8x8xf32>
    %22 = vector.shape_cast %21 : vector<1x8x8xf32> to vector<8x8xf32>
    %23 = arith.index_cast %arg2 : i32 to index
    %c0_10 = arith.constant 0 : index
    %c0_11 = arith.constant 0 : index
    %24 = vector.load %arg14[%23, %c0_10, %c0_11] : memref<4x8x8xf32, #tpu.memory_space<vmem>>, vector<1x8x8xf32>
    %25 = vector.shape_cast %24 : vector<1x8x8xf32> to vector<8x8xf32>
    %cst_12 = arith.constant dense<0.000000e+00> : vector<8x8xf32>
    %26 = tpu.matmul %19, %22, %cst_12 {dimension_numbers = #tpu.dot_dimension_numbers<[1], [1], [0], [0], [0, 0, 1, 0], [], []>} : vector<8x8xf32>, vector<8x8xf32>, vector<8x8xf32> -> vector<8x8xf32>
    %cst_13 = arith.constant dense<0xFF800000> : vector<8xf32>
    %27 = vector.multi_reduction <maximumf>, %26, %cst_13 [1] : vector<8x8xf32> to vector<8xf32>
    %28 = vector.shape_cast %27 : vector<8xf32> to vector<8x1xf32>
    %29 = vector.broadcast %28 : vector<8x1xf32> to vector<8x8xf32>
    %30 = arith.subf %26, %29 : vector<8x8xf32>
    %31 = math.exp %30 : vector<8x8xf32>
    %cst_14 = arith.constant dense<0.000000e+00> : vector<8xf32>
    %32 = vector.multi_reduction <add>, %31, %cst_14 [1] : vector<8x8xf32> to vector<8xf32>
    %33 = vector.shape_cast %32 : vector<8xf32> to vector<8x1xf32>
    %34 = tpu.reciprocal %33 {approx = true} : vector<8x1xf32> -> vector<8x1xf32>
    %35 = arith.mulf %33, %34 : vector<8x1xf32>
    %cst_15 = arith.constant 2.000000e+00 : f32
    %36 = vector.broadcast %cst_15 : f32 to vector<8x1xf32>
    %37 = arith.subf %36, %35 : vector<8x1xf32>
    %38 = arith.mulf %34, %37 : vector<8x1xf32>
    %cst_16 = arith.constant dense<0.000000e+00> : vector<8x8xf32>
    %39 = tpu.matmul %31, %25, %cst_16 {dimension_numbers = #tpu.dot_dimension_numbers<[1], [0], [0], [1], [0, 0, 1, 1], [], []>} : vector<8x8xf32>, vector<8x8xf32>, vector<8x8xf32> -> vector<8x8xf32>
    %40 = vector.broadcast %38 : vector<8x1xf32> to vector<8x8xf32>
    %41 = arith.mulf %39, %40 : vector<8x8xf32>
    %c0_17 = arith.constant 0 : index
    %c0_18 = arith.constant 0 : index
    %42 = vector.load %arg15[%c0_17, %c0_18] : memref<8x32xf32, #tpu.memory_space<vmem>>, vector<8x32xf32>
    %43 = arith.index_cast %arg2 : i32 to index
    %c0_19 = arith.constant 0 : index
    %c0_20 = arith.constant 0 : index
    %44 = vector.load %arg10[%43, %c0_19, %c0_20] : memref<4x8x32xf32, #tpu.memory_space<vmem>>, vector<1x8x32xf32>
    %45 = vector.shape_cast %44 : vector<1x8x32xf32> to vector<8x32xf32>
    %cst_21 = arith.constant dense<0.000000e+00> : vector<8x32xf32>
    %46 = tpu.matmul %41, %45, %cst_21 {dimension_numbers = #tpu.dot_dimension_numbers<[1], [0], [0], [1], [0, 0, 1, 1], [], []>} : vector<8x8xf32>, vector<8x32xf32>, vector<8x32xf32> -> vector<8x32xf32>
    %47 = arith.addf %42, %46 : vector<8x32xf32>
    %c0_22 = arith.constant 0 : index
    %c0_23 = arith.constant 0 : index
    %48 = vector.load %arg15[%c0_22, %c0_23] : memref<8x32xf32, #tpu.memory_space<vmem>>, vector<8x32xf32>
    tpu.vector_store %arg15[%c0_22, %c0_23], %47 {strides = array<i32>} : memref<8x32xf32, #tpu.memory_space<vmem>>, vector<8x32xf32>,
    %c3_i32 = arith.constant 3 : i32
    %49 = arith.cmpi eq, %arg2, %c3_i32 : i32
    %50 = arith.extui %49 : i1 to i32
    %c0_i32_24 = arith.constant 0 : i32
    %51 = arith.cmpi ne, %50, %c0_i32_24 : i32
    scf.if %51 {
      %c0_25 = arith.constant 0 : index
      %c0_26 = arith.constant 0 : index
      %52 = vector.load %arg15[%c0_25, %c0_26] : memref<8x32xf32, #tpu.memory_space<vmem>>, vector<8x32xf32>
      %c0_27 = arith.constant 0 : index
      %c0_28 = arith.constant 0 : index
      %c0_29 = arith.constant 0 : index
      %53 = vector.load %arg11[%c0_27, %c0_28, %c0_29] : memref<1x1x32xf32, #tpu.memory_space<vmem>>, vector<1x1x32xf32>
      %54 = vector.shape_cast %53 : vector<1x1x32xf32> to vector<1x32xf32>
      %55 = vector.broadcast %54 : vector<1x32xf32> to vector<8x32xf32>
      %56 = arith.addf %52, %55 : vector<8x32xf32>
      %c0_30 = arith.constant 0 : index
      %c0_31 = arith.constant 0 : index
      %c0_32 = arith.constant 0 : index
      %57 = vector.load %arg12[%c0_30, %c0_31, %c0_32] : memref<1x8x32xf32, #tpu.memory_space<vmem>>, vector<1x8x32xf32>
      %58 = vector.shape_cast %57 : vector<1x8x32xf32> to vector<8x32xf32>
      %59 = vector.shape_cast %56 : vector<8x32xf32> to vector<1x8x32xf32>
      tpu.vector_store %arg12[%c0_30, %c0_31, %c0_32], %59 {strides = array<i32>} : memref<1x8x32xf32, #tpu.memory_space<vmem>>, vector<1x8x32xf32>,
    } else {
    }
    return
  }
  func.func @transform_0(%arg0: i32, %arg1: i32, %arg2: i32) -> (i32, i32, i32) {
    %c0_i32 = arith.constant 0 : i32
    %c0_i32_0 = arith.constant 0 : i32
    %c0_i32_1 = arith.constant 0 : i32
    return %arg0, %c0_i32, %c0_i32_0 : i32, i32, i32
  }
  func.func @transform_1(%arg0: i32, %arg1: i32, %arg2: i32) -> (i32, i32, i32) {
    %c0_i32 = arith.constant 0 : i32
    %c0_i32_0 = arith.constant 0 : i32
    %c0_i32_1 = arith.constant 0 : i32
    %c0_i32_2 = arith.constant 0 : i32
    return %c0_i32, %c0_i32_0, %c0_i32_1 : i32, i32, i32
  }
  func.func @transform_2(%arg0: i32, %arg1: i32, %arg2: i32) -> (i32, i32, i32) {
    %c0_i32 = arith.constant 0 : i32
    %c0_i32_0 = arith.constant 0 : i32
    %c0_i32_1 = arith.constant 0 : i32
    %c0_i32_2 = arith.constant 0 : i32
    return %c0_i32, %c0_i32_0, %c0_i32_1 : i32, i32, i32
  }
  func.func @transform_3(%arg0: i32, %arg1: i32, %arg2: i32) -> (i32, i32, i32) {
    %c0_i32 = arith.constant 0 : i32
    %c0_i32_0 = arith.constant 0 : i32
    %c0_i32_1 = arith.constant 0 : i32
    %c0_i32_2 = arith.constant 0 : i32
    return %c0_i32, %c0_i32_0, %c0_i32_1 : i32, i32, i32
  }
  func.func @transform_4(%arg0: i32, %arg1: i32, %arg2: i32) -> (i32, i32, i32) {
    %c0_i32 = arith.constant 0 : i32
    %c0_i32_0 = arith.constant 0 : i32
    %c0_i32_1 = arith.constant 0 : i32
    %c0_i32_2 = arith.constant 0 : i32
    return %c0_i32, %c0_i32_0, %c0_i32_1 : i32, i32, i32
  }
  func.func @transform_5(%arg0: i32, %arg1: i32, %arg2: i32) -> (i32, i32, i32) {
    %c0_i32 = arith.constant 0 : i32
    %c0_i32_0 = arith.constant 0 : i32
    %c0_i32_1 = arith.constant 0 : i32
    %c0_i32_2 = arith.constant 0 : i32
    return %c0_i32, %c0_i32_0, %c0_i32_1 : i32, i32, i32
  }
  func.func @transform_6(%arg0: i32, %arg1: i32, %arg2: i32) -> (i32, i32, i32) {
    %c0_i32 = arith.constant 0 : i32
    %c0_i32_0 = arith.constant 0 : i32
    %c0_i32_1 = arith.constant 0 : i32
    %c0_i32_2 = arith.constant 0 : i32
    return %c0_i32, %c0_i32_0, %c0_i32_1 : i32, i32, i32
  }
  func.func @transform_7(%arg0: i32, %arg1: i32, %arg2: i32) -> (i32, i32, i32) {
    %c0_i32 = arith.constant 0 : i32
    %c0_i32_0 = arith.constant 0 : i32
    %c0_i32_1 = arith.constant 0 : i32
    %c0_i32_2 = arith.constant 0 : i32
    return %c0_i32, %c0_i32_0, %c0_i32_1 : i32, i32, i32
  }
  func.func @transform_8(%arg0: i32, %arg1: i32, %arg2: i32) -> (i32, i32, i32) {
    %c0_i32 = arith.constant 0 : i32
    %c0_i32_0 = arith.constant 0 : i32
    %c0_i32_1 = arith.constant 0 : i32
    %c0_i32_2 = arith.constant 0 : i32
    return %c0_i32, %c0_i32_0, %c0_i32_1 : i32, i32, i32
  }
  func.func @transform_9(%arg0: i32, %arg1: i32, %arg2: i32) -> (i32, i32, i32) {
    %c0_i32 = arith.constant 0 : i32
    %c0_i32_0 = arith.constant 0 : i32
    return %arg0, %arg1, %c0_i32 : i32, i32, i32
  }
}

</mosaic_0001>

<llo_original>
// kernel: tpu_custom_call.1
$region0: #{tpu_custom_call.1}
  #allocation0 [shape = 'u32[]', space=smem, size = 0x4, offset = 0x4, fixed_abs, tag = 'smem constant byte address 0x4 - core index']
  #allocation1 [shape = 'u32[144,128]{1,0:T(1,128)}', space=vmem, size = 0x12000, scoped, tag = 'internal scratch']
  #allocation2 [shape = 'f32[4,8,8]{2,1,0:T(8,128)}', space=vmem, size = 0x4000, scoped, tag = 'scratch operand']
  #allocation3 [shape = 'f32[4,8,8]{2,1,0:T(8,128)}', space=vmem, size = 0x4000, scoped, tag = 'scratch operand']
  #allocation4 [shape = 'f32[8,32]{1,0:T(8,128)}', space=vmem, size = 0x1000, scoped, tag = 'scratch operand']
  %s0 = inlined_call_operand.vmem [shape: f32[2,8,32], index: 0, kind: input, shape index: {}]
  %s1 = inlined_call_operand.vmem [shape: f32[4,32,8], index: 1, kind: input, shape index: {}]
  %s2 = inlined_call_operand.vmem [shape: f32[4,1,8], index: 2, kind: input, shape index: {}]
  %s3 = inlined_call_operand.vmem [shape: f32[4,32,8], index: 3, kind: input, shape index: {}]
  %s4 = inlined_call_operand.vmem [shape: f32[4,1,8], index: 4, kind: input, shape index: {}]
  %s5 = inlined_call_operand.vmem [shape: f32[4,32,8], index: 5, kind: input, shape index: {}]
  %s6 = inlined_call_operand.vmem [shape: f32[4,1,8], index: 6, kind: input, shape index: {}]
  %s7 = inlined_call_operand.vmem [shape: f32[4,8,32], index: 7, kind: input, shape index: {}]
  %s8 = inlined_call_operand.vmem [shape: f32[1,1,32], index: 8, kind: input, shape index: {}]
  %s9 = inlined_call_operand.hbm [shape: f32[2,8,32], index: 9, kind: output, shape index: {}]
  %s10 = sld [smem:[#allocation0]]
  $region81: #{tpu_custom_call.1} parent=0
    _
  %s12 = ssub.s32 1, %s10
  %s13 = scalar_select 0, %s12, %s10
  $region1: #{tpu_custom_call.1} parent=0
    #allocation5 [shape = 'u8[8192]{0}', space=vmem, size = 0x2000, scoped, tag = 'output window, operand 0']
    #allocation6 [shape = 's32[2]{0}', space=sflag, size = 0x8, scoped, tag = 'scoped memory for tpu_custom_call.1']
    %14 = vsyncpa [#allocation6], 0
    %s15 = scalar_lea.sflag [#allocation6], 1
    %16 = vsyncpa %s15, 0
    loop: start=0, step=1, limit=10
    $region2: #{tpu_custom_call.1} parent=1 // loop_pre_header
      _
    $region3: #{tpu_custom_call.1} parent=1 // loop_header
      %s18 = sphi 0, %s22
      %p19 = scmp.ge.s32.totalorder %s18, 10
      %s25 = sphi 0, %s44
      %s26 = sphi 0, %s40
      %s27 = sphi 0, %s36
      %s28 = sphi 0, %s25
      %s29 = sphi 0, %s26
      %s30 = sphi 0, %s27
      %s31 = sphi 0, %s28
      %s32 = sphi 0, %s29
      %s33 = sphi 0, %s30
      %s47 = sphi 0, %s49
      %s50 = sphi 0, %s47
      %s51 = sphi 0, %s50
      %s67 = sphi 0, %s51
      %s71 = sphi 0, %s71
      %s73 = sphi 0, %s71
      %s74 = sphi 0, %s73
      %s88 = sphi 0, %s74
      %s92 = sphi 0, %s92
      %s94 = sphi 0, %s92
      %s95 = sphi 0, %s94
      %s109 = sphi 0, %s95
      %s113 = sphi 0, %s113
      %s115 = sphi 0, %s113
      %s116 = sphi 0, %s115
      %s130 = sphi 0, %s116
      %s134 = sphi 0, %s134
      %s136 = sphi 0, %s134
      %s137 = sphi 0, %s136
      %s151 = sphi 0, %s137
      %s155 = sphi 0, %s155
      %s157 = sphi 0, %s155
      %s158 = sphi 0, %s157
      %s172 = sphi 0, %s158
      %s176 = sphi 0, %s176
      %s178 = sphi 0, %s176
      %s179 = sphi 0, %s178
      %s193 = sphi 0, %s179
      %s197 = sphi 0, %s197
      %s199 = sphi 0, %s197
      %s200 = sphi 0, %s199
      %s214 = sphi 0, %s200
      %s218 = sphi 0, %s218
      %s220 = sphi 0, %s218
      %s221 = sphi 0, %s220
      %s235 = sphi 0, %s221
      %s243 = sphi 0, %s245
      %s246 = sphi 0, %s243
      %s247 = sphi 0, %s246
      %s263 = sphi 0, %s247
    $region4: #{tpu_custom_call.1} parent=1 // loop_header_branch
      %21 = sbr.rel (%p19) target = $region8
    $region5: #{tpu_custom_call.1} parent=1 // loop_body
      %s23 = ssub.s32 %s18, 1
      %s24 = ssub.s32 %s18, 2
      %s34 = sadd.s32 1, %s27
      %p35 = scmp.ge.s32.totalorder %s34, 4
      %s36 = scalar_select %p35, 0, %s34
      %s37 = sadd.s32 1, %s26
      %s38 = scalar_select %p35, %s37, %s26
      %p39 = scmp.ge.s32.totalorder %s38, 1
      %s40 = scalar_select %p39, 0, %s38
      %s41 = sadd.s32 1, %s25
      %s42 = scalar_select %p39, %s41, %s25
      %p43 = scmp.ge.s32.totalorder %s42, 2
      %s44 = scalar_select %p43, 0, %s42
      %s45 = ssub.s32 %s25, %s44
      %p46 = scmp.eq.s32.totalorder %s45, 0
      %s48 = sadd.s32 %s47, 1
      %s49 = scalar_select %p46, %s47, %s48
      %p52 = pneg %p46
      %p53 = scmp.eq.s32.totalorder %s18, 7
      %p54 = por %p52, %p53
      %p55 = scmp.ne.s32.totalorder %s47, %s50
      %p56 = scmp.eq.s32.totalorder %s18, 0
      %p57 = por %p55, %p56
      %p58 = scmp.ne.s32.totalorder %s47, %s50
      %p59 = scmp.eq.s32.totalorder %s23, 7
      %p60 = por %p58, %p59
      %p61 = scmp.ne.s32.totalorder %s50, %s51
      %p62 = scmp.eq.s32.totalorder %s23, 0
      %p63 = por %p61, %p62
      %p64 = scmp.ne.s32.totalorder %s50, %s51
      %p65 = scmp.eq.s32.totalorder %s24, 7
      %p66 = por %p64, %p65
      %p68 = scmp.ne.s32.totalorder %s51, %s67
      %p69 = scmp.eq.s32.totalorder %s24, 0
      %p70 = por %p68, %p69
      %s72 = sadd.s32 %s71, 1
      %p75 = scmp.eq.s32.totalorder %s18, 7
      %p76 = scmp.ne.s32.totalorder %s71, %s73
      %p77 = scmp.eq.s32.totalorder %s18, 0
      %p78 = por %p76, %p77
      %p79 = scmp.ne.s32.totalorder %s71, %s73
      %p80 = scmp.eq.s32.totalorder %s23, 7
      %p81 = por %p79, %p80
      %p82 = scmp.ne.s32.totalorder %s73, %s74
      %p83 = scmp.eq.s32.totalorder %s23, 0
      %p84 = por %p82, %p83
      %p85 = scmp.ne.s32.totalorder %s73, %s74
      %p86 = scmp.eq.s32.totalorder %s24, 7
      %p87 = por %p85, %p86
      %p89 = scmp.ne.s32.totalorder %s74, %s88
      %p90 = scmp.eq.s32.totalorder %s24, 0
      %p91 = por %p89, %p90
      %s93 = sadd.s32 %s92, 1
      %p96 = scmp.eq.s32.totalorder %s18, 7
      %p97 = scmp.ne.s32.totalorder %s92, %s94
      %p98 = scmp.eq.s32.totalorder %s18, 0
      %p99 = por %p97, %p98
      %p100 = scmp.ne.s32.totalorder %s92, %s94
      %p101 = scmp.eq.s32.totalorder %s23, 7
      %p102 = por %p100, %p101
      %p103 = scmp.ne.s32.totalorder %s94, %s95
      %p104 = scmp.eq.s32.totalorder %s23, 0
      %p105 = por %p103, %p104
      %p106 = scmp.ne.s32.totalorder %s94, %s95
      %p107 = scmp.eq.s32.totalorder %s24, 7
      %p108 = por %p106, %p107
      %p110 = scmp.ne.s32.totalorder %s95, %s109
      %p111 = scmp.eq.s32.totalorder %s24, 0
      %p112 = por %p110, %p111
      %s114 = sadd.s32 %s113, 1
      %p117 = scmp.eq.s32.totalorder %s18, 7
      %p118 = scmp.ne.s32.totalorder %s113, %s115
      %p119 = scmp.eq.s32.totalorder %s18, 0
      %p120 = por %p118, %p119
      %p121 = scmp.ne.s32.totalorder %s113, %s115
      %p122 = scmp.eq.s32.totalorder %s23, 7
      %p123 = por %p121, %p122
      %p124 = scmp.ne.s32.totalorder %s115, %s116
      %p125 = scmp.eq.s32.totalorder %s23, 0
      %p126 = por %p124, %p125
      %p127 = scmp.ne.s32.totalorder %s115, %s116
      %p128 = scmp.eq.s32.totalorder %s24, 7
      %p129 = por %p127, %p128
      %p131 = scmp.ne.s32.totalorder %s116, %s130
      %p132 = scmp.eq.s32.totalorder %s24, 0
      %p133 = por %p131, %p132
      %s135 = sadd.s32 %s134, 1
      %p138 = scmp.eq.s32.totalorder %s18, 7
      %p139 = scmp.ne.s32.totalorder %s134, %s136
      %p140 = scmp.eq.s32.totalorder %s18, 0
      %p141 = por %p139, %p140
      %p142 = scmp.ne.s32.totalorder %s134, %s136
      %p143 = scmp.eq.s32.totalorder %s23, 7
      %p144 = por %p142, %p143
      %p145 = scmp.ne.s32.totalorder %s136, %s137
      %p146 = scmp.eq.s32.totalorder %s23, 0
      %p147 = por %p145, %p146
      %p148 = scmp.ne.s32.totalorder %s136, %s137
      %p149 = scmp.eq.s32.totalorder %s24, 7
      %p150 = por %p148, %p149
      %p152 = scmp.ne.s32.totalorder %s137, %s151
      %p153 = scmp.eq.s32.totalorder %s24, 0
      %p154 = por %p152, %p153
      %s156 = sadd.s32 %s155, 1
      %p159 = scmp.eq.s32.totalorder %s18, 7
      %p160 = scmp.ne.s32.totalorder %s155, %s157
      %p161 = scmp.eq.s32.totalorder %s18, 0
      %p162 = por %p160, %p161
      %p163 = scmp.ne.s32.totalorder %s155, %s157
      %p164 = scmp.eq.s32.totalorder %s23, 7
      %p165 = por %p163, %p164
      %p166 = scmp.ne.s32.totalorder %s157, %s158
      %p167 = scmp.eq.s32.totalorder %s23, 0
      %p168 = por %p166, %p167
      %p169 = scmp.ne.s32.totalorder %s157, %s158
      %p170 = scmp.eq.s32.totalorder %s24, 7
      %p171 = por %p169, %p170
      %p173 = scmp.ne.s32.totalorder %s158, %s172
      %p174 = scmp.eq.s32.totalorder %s24, 0
      %p175 = por %p173, %p174
      %s177 = sadd.s32 %s176, 1
      %p180 = scmp.eq.s32.totalorder %s18, 7
      %p181 = scmp.ne.s32.totalorder %s176, %s178
      %p182 = scmp.eq.s32.totalorder %s18, 0
      %p183 = por %p181, %p182
      %p184 = scmp.ne.s32.totalorder %s176, %s178
      %p185 = scmp.eq.s32.totalorder %s23, 7
      %p186 = por %p184, %p185
      %p187 = scmp.ne.s32.totalorder %s178, %s179
      %p188 = scmp.eq.s32.totalorder %s23, 0
      %p189 = por %p187, %p188
      %p190 = scmp.ne.s32.totalorder %s178, %s179
      %p191 = scmp.eq.s32.totalorder %s24, 7
      %p192 = por %p190, %p191
      %p194 = scmp.ne.s32.totalorder %s179, %s193
      %p195 = scmp.eq.s32.totalorder %s24, 0
      %p196 = por %p194, %p195
      %s198 = sadd.s32 %s197, 1
      %p201 = scmp.eq.s32.totalorder %s18, 7
      %p202 = scmp.ne.s32.totalorder %s197, %s199
      %p203 = scmp.eq.s32.totalorder %s18, 0
      %p204 = por %p202, %p203
      %p205 = scmp.ne.s32.totalorder %s197, %s199
      %p206 = scmp.eq.s32.totalorder %s23, 7
      %p207 = por %p205, %p206
      %p208 = scmp.ne.s32.totalorder %s199, %s200
      %p209 = scmp.eq.s32.totalorder %s23, 0
      %p210 = por %p208, %p209
      %p211 = scmp.ne.s32.totalorder %s199, %s200
      %p212 = scmp.eq.s32.totalorder %s24, 7
      %p213 = por %p211, %p212
      %p215 = scmp.ne.s32.totalorder %s200, %s214
      %p216 = scmp.eq.s32.totalorder %s24, 0
      %p217 = por %p215, %p216
      %s219 = sadd.s32 %s218, 1
      %p222 = scmp.eq.s32.totalorder %s18, 7
      %p223 = scmp.ne.s32.totalorder %s218, %s220
      %p224 = scmp.eq.s32.totalorder %s18, 0
      %p225 = por %p223, %p224
      %p226 = scmp.ne.s32.totalorder %s218, %s220
      %p227 = scmp.eq.s32.totalorder %s23, 7
      %p228 = por %p226, %p227
      %p229 = scmp.ne.s32.totalorder %s220, %s221
      %p230 = scmp.eq.s32.totalorder %s23, 0
      %p231 = por %p229, %p230
      %p232 = scmp.ne.s32.totalorder %s220, %s221
      %p233 = scmp.eq.s32.totalorder %s24, 7
      %p234 = por %p232, %p233
      %p236 = scmp.ne.s32.totalorder %s221, %s235
      %p237 = scmp.eq.s32.totalorder %s24, 0
      %p238 = por %p236, %p237
      %s239 = ssub.s32 %s25, %s44
      %s240 = ssub.s32 %s26, %s40
      %s241 = sor.u32 %s239, %s240
      %p242 = scmp.eq.s32.totalorder %s241, 0
      %s244 = sadd.s32 %s243, 1
      %s245 = scalar_select %p242, %s243, %s244
      %p248 = pneg %p242
      %p249 = scmp.eq.s32.totalorder %s18, 7
      %p250 = por %p248, %p249
      %p251 = scmp.ne.s32.totalorder %s243, %s246
      %p252 = scmp.eq.s32.totalorder %s18, 0
      %p253 = por %p251, %p252
      %p254 = scmp.ne.s32.totalorder %s243, %s246
      %p255 = scmp.eq.s32.totalorder %s23, 7
      %p256 = por %p254, %p255
      %p257 = scmp.ne.s32.totalorder %s246, %s247
      %p258 = scmp.eq.s32.totalorder %s23, 0
      %p259 = por %p257, %p258
      %p260 = scmp.ne.s32.totalorder %s246, %s247
      %p261 = scmp.eq.s32.totalorder %s24, 7
      %p262 = por %p260, %p261
      %p264 = scmp.ne.s32.totalorder %s247, %s263
      %p265 = scmp.eq.s32.totalorder %s24, 0
      %p266 = por %p264, %p265
      %p267 = scmp.le.s32.totalorder 1, %s18
      %p268 = scmp.lt.s32.totalorder %s18, 9
      %p269 = pnand %p267, %p268
      %p270 = pneg %p269
      // Predicated region
      $region9: #{tpu_custom_call.1} parent=5 // pred_check
        _
      $region10: #{tpu_custom_call.1} parent=5 // pred_check_branch
        %272 = sbr.rel (%p269) target = $region12
      $region11: #{tpu_custom_call.1} parent=5 // pred_region
        %s273 = ssub.s32 %s18, 1
        // Predicated region
        $region13: #{tpu_custom_call.1} parent=11 // pred_check
          %p274 = pneg %p84
        $region14: #{tpu_custom_call.1} parent=11 // pred_check_branch
          %276 = sbr.rel (%p274) target = $region16
        $region15: #{tpu_custom_call.1} parent=11 // pred_region
          _
        $region16: #{tpu_custom_call.1} parent=11 // pred_fallthru
          _
        // Predicated region
        $region17: #{tpu_custom_call.1} parent=11 // pred_check
          %p277 = pneg %p105
        $region18: #{tpu_custom_call.1} parent=11 // pred_check_branch
          %279 = sbr.rel (%p277) target = $region20
        $region19: #{tpu_custom_call.1} parent=11 // pred_region
          _
        $region20: #{tpu_custom_call.1} parent=11 // pred_fallthru
          _
        // Predicated region
        $region21: #{tpu_custom_call.1} parent=11 // pred_check
          %p280 = pneg %p126
        $region22: #{tpu_custom_call.1} parent=11 // pred_check_branch
          %282 = sbr.rel (%p280) target = $region24
        $region23: #{tpu_custom_call.1} parent=11 // pred_region
          _
        $region24: #{tpu_custom_call.1} parent=11 // pred_fallthru
          _
        // Predicated region
        $region25: #{tpu_custom_call.1} parent=11 // pred_check
          %p283 = pneg %p147
        $region26: #{tpu_custom_call.1} parent=11 // pred_check_branch
          %285 = sbr.rel (%p283) target = $region28
        $region27: #{tpu_custom_call.1} parent=11 // pred_region
          _
        $region28: #{tpu_custom_call.1} parent=11 // pred_fallthru
          _
        // Predicated region
        $region29: #{tpu_custom_call.1} parent=11 // pred_check
          %p286 = pneg %p168
        $region30: #{tpu_custom_call.1} parent=11 // pred_check_branch
          %288 = sbr.rel (%p286) target = $region32
        $region31: #{tpu_custom_call.1} parent=11 // pred_region
          _
        $region32: #{tpu_custom_call.1} parent=11 // pred_fallthru
          _
        // Predicated region
        $region33: #{tpu_custom_call.1} parent=11 // pred_check
          %p289 = pneg %p189
        $region34: #{tpu_custom_call.1} parent=11 // pred_check_branch
          %291 = sbr.rel (%p289) target = $region36
        $region35: #{tpu_custom_call.1} parent=11 // pred_region
          _
        $region36: #{tpu_custom_call.1} parent=11 // pred_fallthru
          _
        // Predicated region
        $region37: #{tpu_custom_call.1} parent=11 // pred_check
          %p292 = pneg %p210
        $region38: #{tpu_custom_call.1} parent=11 // pred_check_branch
          %294 = sbr.rel (%p292) target = $region40
        $region39: #{tpu_custom_call.1} parent=11 // pred_region
          _
        $region40: #{tpu_custom_call.1} parent=11 // pred_fallthru
          _
        // Predicated region
        $region41: #{tpu_custom_call.1} parent=11 // pred_check
          %p295 = pneg %p231
        $region42: #{tpu_custom_call.1} parent=11 // pred_check_branch
          %297 = sbr.rel (%p295) target = $region44
        $region43: #{tpu_custom_call.1} parent=11 // pred_region
          _
        $region44: #{tpu_custom_call.1} parent=11 // pred_fallthru
          _
      $region12: #{tpu_custom_call.1} parent=5 // pred_fallthru
        _
      %p298 = scmp.lt.s32.totalorder %s18, 8
      // Predicated region
      $region45: #{tpu_custom_call.1} parent=5 // pred_check
        %p299 = pneg %p298
      $region46: #{tpu_custom_call.1} parent=5 // pred_check_branch
        %301 = sbr.rel (%p299) target = $region48
      $region47: #{tpu_custom_call.1} parent=5 // pred_region
        // Predicated region
        $region49: #{tpu_custom_call.1} parent=47 // pred_check
          %p302 = pneg %p57
        $region50: #{tpu_custom_call.1} parent=47 // pred_check_branch
          %304 = sbr.rel (%p302) target = $region52
        $region51: #{tpu_custom_call.1} parent=47 // pred_region
          %p305 = scmp.lt.s32.totalorder %s25, 1
          %s306 = scalar_select %p305, %s25, 1
          %s307 = smul.addr %s306, 8
          %s308 = scalar_lea.vmem %s0, %s307
        $region52: #{tpu_custom_call.1} parent=47 // pred_fallthru
          _
      $region48: #{tpu_custom_call.1} parent=5 // pred_fallthru
        _
      %p309 = scmp.le.s32.totalorder 1, %s18
      %p310 = scmp.lt.s32.totalorder %s18, 9
      %p311 = pnand %p309, %p310
      %p312 = pneg %p311
      // Predicated region
      $region53: #{tpu_custom_call.1} parent=5 // pred_check
        _
      $region54: #{tpu_custom_call.1} parent=5 // pred_check_branch
        %314 = sbr.rel (%p311) target = $region56
      $region55: #{tpu_custom_call.1} parent=5 // pred_region
        %s315 = ssub.s32 %s18, 1
        %p316 = scmp.lt.s32.totalorder %s28, 1
        %s317 = scalar_select %p316, %s28, 1
        %s318 = smul.addr %s317, 8
        %s319 = scalar_lea.vmem %s0, %s318
        %p320 = pneg %p63
        %p321 = pneg %p60
        %p322 = pneg %p84
        %p323 = pneg %p81
        %p324 = pneg %p105
        %p325 = pneg %p102
        %p326 = pneg %p126
        %p327 = pneg %p123
        %p328 = pneg %p147
        %p329 = pneg %p144
        %p330 = pneg %p168
        %p331 = pneg %p165
        %p332 = pneg %p189
        %p333 = pneg %p186
        %p334 = pneg %p210
        %p335 = pneg %p207
        %p336 = pneg %p231
        %p337 = pneg %p228
        %p338 = pneg %p259
        %p339 = pneg %p256
        %s340 = sand.u32 %s246, 1
        %s341 = scalar_lea.sflag [#allocation6], %s340
        %s342 = sand.u32 %s246, 1
        %s343 = smul.addr %s342, 8
        %s344 = scalar_lea.vmem [#allocation5], %s343
        %p345 = scmp.lt.s32.totalorder %s28, 1
        %s346 = scalar_select %p345, %s28, 1
        %s347 = smul.addr %s346, 8
        %s348 = scalar_lea.vmem %s0, %s347
        %p349 = scmp.eq.s32.totalorder %s29, 0
        // Predicated region
        $region57: #{tpu_custom_call.1} parent=55 // pred_check
          %p350 = pneg %p349
        $region58: #{tpu_custom_call.1} parent=55 // pred_check_branch
          %352 = sbr.rel (%p350) target = $region60
        $region59: #{tpu_custom_call.1} parent=55 // pred_region
          %v353 = vld [vmem:[%s348] sm:$0xff]
          %s354 = smul.u32 %s30, 32
          %s355 = scalar_lea.vmem %s3, %s354
          %v356 = vld [vmem:[%s355] sm:$0xff]
          %v357 = vld [vmem:[%s355 + $0x8] sm:$0xff]
          %v358 = vld [vmem:[%s355 + $0x10] sm:$0xff]
          %v359 = vld [vmem:[%s355 + $0x18] sm:$0xff]
          %s360 = scalar_lea.vmem %s4, %s30
          %v361 = vld [vmem:[%s360] sm:$0x1]
          %v363 = vlaneseq
          %v364 = vshrl.u32 %v363, 7
          %v365 = vsub.s32 0, %v364
          %v366 = vrot.slane %v361, %v365
          %vm368 = vcmask 261120
          %v370 = vsel %vm368, %v353, 0
          %372 = vmatprep.subr.mxu0 0.0
          %373 = vmatpush1.msra.mxu0 %v356
          %374 = vmatprep.subr.mxu0 0.0
          %375 = vmatpush1.msra.mxu0 %v357
          %376 = vmatprep.subr.mxu0 0.0
          %377 = vmatpush1.msra.mxu0 %v358
          %378 = vmatprep.subr.mxu0 0.0
          %379 = vmatpush1.msra.mxu0 %v359
          %380 = vmatprep.subr.mxu0 0.0
          %381 = vmatpush1.msra.mxu0 0.0
          %382 = vmatprep.subr.mxu0 0.0
          %383 = vmatpush1.msra.mxu0 0.0
          %384 = vmatprep.subr.mxu0 0.0
          %385 = vmatpush1.msra.mxu0 0.0
          %386 = vmatprep.subr.mxu0 0.0
          %387 = vmatpush1.msra.mxu0 0.0
          %388 = vmatprep.subr.mxu0 0.0
          %389 = vmatpush1.msra.mxu0 0.0
          %390 = vmatprep.subr.mxu0 0.0
          %391 = vmatpush1.msra.mxu0 0.0
          %392 = vmatprep.subr.mxu0 0.0
          %393 = vmatpush1.msra.mxu0 0.0
          %394 = vmatprep.subr.mxu0 0.0
          %395 = vmatpush1.msra.mxu0 0.0
          %396 = vmatprep.subr.mxu0 0.0
          %397 = vmatpush1.msra.mxu0 0.0
          %398 = vmatprep.subr.mxu0 0.0
          %399 = vmatpush1.msra.mxu0 0.0
          %400 = vmatprep.subr.mxu0 0.0
          %401 = vmatpush1.msra.mxu0 0.0
          %402 = vmatprep.subr.mxu0 0.0
          %403 = vmatpush1.msra.mxu0 0.0
          %404 = vmatprep.subr.mxu0 0.0
          %405 = vmatpush1.msra.mxu0 0.0
          %406 = vmatprep.subr.mxu0 0.0
          %407 = vmatpush1.msra.mxu0 0.0
          %408 = vmatprep.subr.mxu0 0.0
          %409 = vmatpush1.msra.mxu0 0.0
          %410 = vmatprep.subr.mxu0 0.0
          %411 = vmatpush1.msra.mxu0 0.0
          %412 = vmatprep.subr.mxu0 0.0
          %413 = vmatpush1.msra.mxu0 0.0
          %414 = vmatprep.subr.mxu0 0.0
          %415 = vmatpush1.msra.mxu0 0.0
          %416 = vmatprep.subr.mxu0 0.0
          %417 = vmatpush1.msra.mxu0 0.0
          %418 = vmatprep.subr.mxu0 0.0
          %419 = vmatpush1.msra.mxu0 0.0
          %420 = vmatprep.subr.mxu0 0.0
          %421 = vmatpush1.msra.mxu0 0.0
          %422 = vmatprep.subr.mxu0 0.0
          %423 = vmatpush1.msra.mxu0 0.0
          %424 = vmatprep.subr.mxu0 0.0
          %425 = vmatpush1.msra.mxu0 0.0
          %426 = vmatprep.subr.mxu0 0.0
          %427 = vmatpush1.msra.mxu0 0.0
          %428 = vmatprep.subr.mxu0 0.0
          %429 = vmatpush1.msra.mxu0 0.0
          %430 = vmatprep.subr.mxu0 0.0
          %431 = vmatpush1.msra.mxu0 0.0
          %432 = vmatprep.subr.mxu0 0.0
          %433 = vmatpush1.msra.mxu0 0.0
          %434 = vmatprep.subr.mxu0 0.0
          %435 = vmatpush1.msra.mxu0 0.0
          %436 = vmatprep.mubr.f32.mxu0 0.0
          %437 = vmatmul.mubr.f32.gmra.mrb[0].mxu0 %v370
          %v438 = vpop.f32.mrb[0].mxu0
          %v439 = vadd.f32 %v366, %v438
          %v440 = vpop.f32.mrb[0].mxu0
          %441 = vdwg.mxu0
          %s442 = scalar_lea.vmem %s5, %s354
          %v443 = vld [vmem:[%s442] sm:$0xff]
          %v444 = vld [vmem:[%s442 + $0x8] sm:$0xff]
          %v445 = vld [vmem:[%s442 + $0x10] sm:$0xff]
          %v446 = vld [vmem:[%s442 + $0x18] sm:$0xff]
          %s447 = scalar_lea.vmem %s6, %s30
          %v448 = vld [vmem:[%s447] sm:$0x1]
          %v450 = vlaneseq
          %v451 = vshrl.u32 %v450, 7
          %v452 = vsub.s32 0, %v451
          %v453 = vrot.slane %v448, %v452
          %455 = vmatprep.subr.mxu0 0.0
          %456 = vmatpush1.msra.mxu0 %v443
          %457 = vmatprep.subr.mxu0 0.0
          %458 = vmatpush1.msra.mxu0 %v444
          %459 = vmatprep.subr.mxu0 0.0
          %460 = vmatpush1.msra.mxu0 %v445
          %461 = vmatprep.subr.mxu0 0.0
          %462 = vmatpush1.msra.mxu0 %v446
          %463 = vmatprep.subr.mxu0 0.0
          %464 = vmatpush1.msra.mxu0 0.0
          %465 = vmatprep.subr.mxu0 0.0
          %466 = vmatpush1.msra.mxu0 0.0
          %467 = vmatprep.subr.mxu0 0.0
          %468 = vmatpush1.msra.mxu0 0.0
          %469 = vmatprep.subr.mxu0 0.0
          %470 = vmatpush1.msra.mxu0 0.0
          %471 = vmatprep.subr.mxu0 0.0
          %472 = vmatpush1.msra.mxu0 0.0
          %473 = vmatprep.subr.mxu0 0.0
          %474 = vmatpush1.msra.mxu0 0.0
          %475 = vmatprep.subr.mxu0 0.0
          %476 = vmatpush1.msra.mxu0 0.0
          %477 = vmatprep.subr.mxu0 0.0
          %478 = vmatpush1.msra.mxu0 0.0
          %479 = vmatprep.subr.mxu0 0.0
          %480 = vmatpush1.msra.mxu0 0.0
          %481 = vmatprep.subr.mxu0 0.0
          %482 = vmatpush1.msra.mxu0 0.0
          %483 = vmatprep.subr.mxu0 0.0
          %484 = vmatpush1.msra.mxu0 0.0
          %485 = vmatprep.subr.mxu0 0.0
          %486 = vmatpush1.msra.mxu0 0.0
          %487 = vmatprep.subr.mxu0 0.0
          %488 = vmatpush1.msra.mxu0 0.0
          %489 = vmatprep.subr.mxu0 0.0
          %490 = vmatpush1.msra.mxu0 0.0
          %491 = vmatprep.subr.mxu0 0.0
          %492 = vmatpush1.msra.mxu0 0.0
          %493 = vmatprep.subr.mxu0 0.0
          %494 = vmatpush1.msra.mxu0 0.0
          %495 = vmatprep.subr.mxu0 0.0
          %496 = vmatpush1.msra.mxu0 0.0
          %497 = vmatprep.subr.mxu0 0.0
          %498 = vmatpush1.msra.mxu0 0.0
          %499 = vmatprep.subr.mxu0 0.0
          %500 = vmatpush1.msra.mxu0 0.0
          %501 = vmatprep.subr.mxu0 0.0
          %502 = vmatpush1.msra.mxu0 0.0
          %503 = vmatprep.subr.mxu0 0.0
          %504 = vmatpush1.msra.mxu0 0.0
          %505 = vmatprep.subr.mxu0 0.0
          %506 = vmatpush1.msra.mxu0 0.0
          %507 = vmatprep.subr.mxu0 0.0
          %508 = vmatpush1.msra.mxu0 0.0
          %509 = vmatprep.subr.mxu0 0.0
          %510 = vmatpush1.msra.mxu0 0.0
          %511 = vmatprep.subr.mxu0 0.0
          %512 = vmatpush1.msra.mxu0 0.0
          %513 = vmatprep.subr.mxu0 0.0
          %514 = vmatpush1.msra.mxu0 0.0
          %515 = vmatprep.subr.mxu0 0.0
          %516 = vmatpush1.msra.mxu0 0.0
          %517 = vmatprep.subr.mxu0 0.0
          %518 = vmatpush1.msra.mxu0 0.0
          %519 = vmatprep.mubr.f32.mxu0 0.0
          %520 = vmatmul.mubr.f32.gmra.mrb[0].mxu0 %v370
          %v521 = vpop.f32.mrb[0].mxu0
          %v522 = vadd.f32 %v453, %v521
          %v523 = vpop.f32.mrb[0].mxu0
          %524 = vdwg.mxu0
          %s525 = smul.u32 %s30, 8
          %s526 = scalar_lea.vmem [#allocation2], %s525
          %vm527 = vcmask 64512
          %528 = vst.msk [vmem:[%s526] sm:$0xff] %vm527, %v439
          %s529 = scalar_lea.vmem [#allocation3], %s525
          %530 = vst.msk [vmem:[%s529] sm:$0xff] %vm527, %v522
        $region60: #{tpu_custom_call.1} parent=55 // pred_fallthru
          _
        %p531 = scmp.eq.s32.totalorder %s30, 0
        // Predicated region
        $region61: #{tpu_custom_call.1} parent=55 // pred_check
          %p532 = pneg %p531
        $region62: #{tpu_custom_call.1} parent=55 // pred_check_branch
          %534 = sbr.rel (%p532) target = $region64
        $region63: #{tpu_custom_call.1} parent=55 // pred_region
          %vm535 = vcmask 261120
          %536 = vst.msk [vmem:[#allocation4] sm:$0xff] %vm535, 0.0
        $region64: #{tpu_custom_call.1} parent=55 // pred_fallthru
          _
        %s537 = smul.u32 %s29, 8
        %s538 = scalar_lea.vmem %s348, %s537
        %v539 = vld [vmem:[%s538] sm:$0xff]
        %s540 = smul.u32 %s30, 32
        %s541 = scalar_lea.vmem %s1, %s540
        %v542 = vld [vmem:[%s541] sm:$0xff]
        %v543 = vld [vmem:[%s541 + $0x8] sm:$0xff]
        %v544 = vld [vmem:[%s541 + $0x10] sm:$0xff]
        %v545 = vld [vmem:[%s541 + $0x18] sm:$0xff]
        %s546 = scalar_lea.vmem %s2, %s30
        %v547 = vld [vmem:[%s546] sm:$0x1]
        %v549 = vlaneseq
        %v550 = vshrl.u32 %v549, 7
        %v551 = vsub.s32 0, %v550
        %v552 = vrot.slane %v547, %v551
        %vm554 = vcmask 261120
        %v556 = vsel %vm554, %v539, 0
        %558 = vmatprep.subr.mxu0 0.0
        %559 = vmatpush1.msra.mxu0 %v542
        %560 = vmatprep.subr.mxu0 0.0
        %561 = vmatpush1.msra.mxu0 %v543
        %562 = vmatprep.subr.mxu0 0.0
        %563 = vmatpush1.msra.mxu0 %v544
        %564 = vmatprep.subr.mxu0 0.0
        %565 = vmatpush1.msra.mxu0 %v545
        %566 = vmatprep.subr.mxu0 0.0
        %567 = vmatpush1.msra.mxu0 0.0
        %568 = vmatprep.subr.mxu0 0.0
        %569 = vmatpush1.msra.mxu0 0.0
        %570 = vmatprep.subr.mxu0 0.0
        %571 = vmatpush1.msra.mxu0 0.0
        %572 = vmatprep.subr.mxu0 0.0
        %573 = vmatpush1.msra.mxu0 0.0
        %574 = vmatprep.subr.mxu0 0.0
        %575 = vmatpush1.msra.mxu0 0.0
        %576 = vmatprep.subr.mxu0 0.0
        %577 = vmatpush1.msra.mxu0 0.0
        %578 = vmatprep.subr.mxu0 0.0
        %579 = vmatpush1.msra.mxu0 0.0
        %580 = vmatprep.subr.mxu0 0.0
        %581 = vmatpush1.msra.mxu0 0.0
        %582 = vmatprep.subr.mxu0 0.0
        %583 = vmatpush1.msra.mxu0 0.0
        %584 = vmatprep.subr.mxu0 0.0
        %585 = vmatpush1.msra.mxu0 0.0
        %586 = vmatprep.subr.mxu0 0.0
        %587 = vmatpush1.msra.mxu0 0.0
        %588 = vmatprep.subr.mxu0 0.0
        %589 = vmatpush1.msra.mxu0 0.0
        %590 = vmatprep.subr.mxu0 0.0
        %591 = vmatpush1.msra.mxu0 0.0
        %592 = vmatprep.subr.mxu0 0.0
        %593 = vmatpush1.msra.mxu0 0.0
        %594 = vmatprep.subr.mxu0 0.0
        %595 = vmatpush1.msra.mxu0 0.0
        %596 = vmatprep.subr.mxu0 0.0
        %597 = vmatpush1.msra.mxu0 0.0
        %598 = vmatprep.subr.mxu0 0.0
        %599 = vmatpush1.msra.mxu0 0.0
        %600 = vmatprep.subr.mxu0 0.0
        %601 = vmatpush1.msra.mxu0 0.0
        %602 = vmatprep.subr.mxu0 0.0
        %603 = vmatpush1.msra.mxu0 0.0
        %604 = vmatprep.subr.mxu0 0.0
        %605 = vmatpush1.msra.mxu0 0.0
        %606 = vmatprep.subr.mxu0 0.0
        %607 = vmatpush1.msra.mxu0 0.0
        %608 = vmatprep.subr.mxu0 0.0
        %609 = vmatpush1.msra.mxu0 0.0
        %610 = vmatprep.subr.mxu0 0.0
        %611 = vmatpush1.msra.mxu0 0.0
        %612 = vmatprep.subr.mxu0 0.0
        %613 = vmatpush1.msra.mxu0 0.0
        %614 = vmatprep.subr.mxu0 0.0
        %615 = vmatpush1.msra.mxu0 0.0
        %616 = vmatprep.subr.mxu0 0.0
        %617 = vmatpush1.msra.mxu0 0.0
        %618 = vmatprep.subr.mxu0 0.0
        %619 = vmatpush1.msra.mxu0 0.0
        %620 = vmatprep.subr.mxu0 0.0
        %621 = vmatpush1.msra.mxu0 0.0
        %622 = vmatprep.mubr.f32.mxu0 0.0
        %623 = vmatmul.mubr.f32.gmra.mrb[0].mxu0 %v556
        %v624 = vpop.f32.mrb[0].mxu0
        %v625 = vadd.f32 %v552, %v624
        %v626 = vpop.f32.mrb[0].mxu0
        %627 = vdwg.mxu0
        %s628 = smul.u32 %s30, 8
        %s629 = scalar_lea.vmem [#allocation2], %s628
        %v630 = vld [vmem:[%s629] sm:$0xff]
        %s631 = scalar_lea.vmem [#allocation3], %s628
        %v632 = vld [vmem:[%s631] sm:$0xff]
        %vm633 = vcmask 64512
        %v635 = vsel %vm633, %v625, 0
        %v638 = vsel %vm633, %v630, 0
        %640 = vmatprep.subr.mxu0 0.0
        %641 = vmatpush1.xpose.msra.mxu0 %v638
        %642 = vmatprep.subr.mxu0 0.0
        %643 = vmatpush1.xpose.msra.mxu0 0.0
        %644 = vmatprep.subr.mxu0 0.0
        %645 = vmatpush1.xpose.msra.mxu0 0.0
        %646 = vmatprep.subr.mxu0 0.0
        %647 = vmatpush1.xpose.msra.mxu0 0.0
        %648 = vmatprep.subr.mxu0 0.0
        %649 = vmatpush1.xpose.msra.mxu0 0.0
        %650 = vmatprep.subr.mxu0 0.0
        %651 = vmatpush1.xpose.msra.mxu0 0.0
        %652 = vmatprep.subr.mxu0 0.0
        %653 = vmatpush1.xpose.msra.mxu0 0.0
        %654 = vmatprep.subr.mxu0 0.0
        %655 = vmatpush1.xpose.msra.mxu0 0.0
        %656 = vmatprep.subr.mxu0 0.0
        %657 = vmatpush1.xpose.msra.mxu0 0.0
        %658 = vmatprep.subr.mxu0 0.0
        %659 = vmatpush1.xpose.msra.mxu0 0.0
        %660 = vmatprep.subr.mxu0 0.0
        %661 = vmatpush1.xpose.msra.mxu0 0.0
        %662 = vmatprep.subr.mxu0 0.0
        %663 = vmatpush1.xpose.msra.mxu0 0.0
        %664 = vmatprep.subr.mxu0 0.0
        %665 = vmatpush1.xpose.msra.mxu0 0.0
        %666 = vmatprep.subr.mxu0 0.0
        %667 = vmatpush1.xpose.msra.mxu0 0.0
        %668 = vmatprep.subr.mxu0 0.0
        %669 = vmatpush1.xpose.msra.mxu0 0.0
        %670 = vmatprep.subr.mxu0 0.0
        %671 = vmatpush1.xpose.msra.mxu0 0.0
        %672 = vmatprep.subr.mxu0 0.0
        %673 = vmatpush1.xpose.msra.mxu0 0.0
        %674 = vmatprep.subr.mxu0 0.0
        %675 = vmatpush1.xpose.msra.mxu0 0.0
        %676 = vmatprep.subr.mxu0 0.0
        %677 = vmatpush1.xpose.msra.mxu0 0.0
        %678 = vmatprep.subr.mxu0 0.0
        %679 = vmatpush1.xpose.msra.mxu0 0.0
        %680 = vmatprep.subr.mxu0 0.0
        %681 = vmatpush1.xpose.msra.mxu0 0.0
        %682 = vmatprep.subr.mxu0 0.0
        %683 = vmatpush1.xpose.msra.mxu0 0.0
        %684 = vmatprep.subr.mxu0 0.0
        %685 = vmatpush1.xpose.msra.mxu0 0.0
        %686 = vmatprep.subr.mxu0 0.0
        %687 = vmatpush1.xpose.msra.mxu0 0.0
        %688 = vmatprep.subr.mxu0 0.0
        %689 = vmatpush1.xpose.msra.mxu0 0.0
        %690 = vmatprep.subr.mxu0 0.0
        %691 = vmatpush1.xpose.msra.mxu0 0.0
        %692 = vmatprep.subr.mxu0 0.0
        %693 = vmatpush1.xpose.msra.mxu0 0.0
        %694 = vmatprep.subr.mxu0 0.0
        %695 = vmatpush1.xpose.msra.mxu0 0.0
        %696 = vmatprep.subr.mxu0 0.0
        %697 = vmatpush1.xpose.msra.mxu0 0.0
        %698 = vmatprep.subr.mxu0 0.0
        %699 = vmatpush1.xpose.msra.mxu0 0.0
        %700 = vmatprep.subr.mxu0 0.0
        %701 = vmatpush1.xpose.msra.mxu0 0.0
        %702 = vmatprep.subr.mxu0 0.0
        %703 = vmatpush1.xpose.msra.mxu0 0.0
        %704 = vmatprep.mubr.f32.mxu0 0.0
        %705 = vmatmul.mubr.f32.gmra.mrb[0].mxu0 %v635
        %v706 = vpop.f32.mrb[0].mxu0
        %v707 = vadd.f32 0.0, %v706
        %v708 = vpop.f32.mrb[0].mxu0
        %709 = vdwg.mxu0
        %v710 = vsel %vm633, %v707, -inf
        %711 = vmax.xlane.f32.xlu0 %v710
        %v712 = vpop.xlane.xlu0 %711
        %v713 = vsub.f32 %v707, %v712
        %v714 = vmul.f32 %v713, 1.442695
        %v715 = vpow.pop %v714
        %v716 = vsel %vm633, %v715, 0.0
        %717 = vadd.xlane.f32.xlu0 %v716
        %v718 = vpop.xlane.xlu0 %717
        %v719 = vrcp.pop %v718
        %v720 = vmul.f32 %v718, %v719
        %v721 = vsub.f32 2.0, %v720
        %v722 = vmul.f32 %v719, %v721
        %v724 = vsel %vm633, %v715, 0
        %726 = vmatprep.subr.mxu0 0.0
        %727 = vmatpush1.msra.mxu0 %v632
        %728 = vmatprep.subr.mxu0 0.0
        %729 = vmatpush1.msra.mxu0 0.0
        %730 = vmatprep.subr.mxu0 0.0
        %731 = vmatpush1.msra.mxu0 0.0
        %732 = vmatprep.subr.mxu0 0.0
        %733 = vmatpush1.msra.mxu0 0.0
        %734 = vmatprep.subr.mxu0 0.0
        %735 = vmatpush1.msra.mxu0 0.0
        %736 = vmatprep.subr.mxu0 0.0
        %737 = vmatpush1.msra.mxu0 0.0
        %738 = vmatprep.subr.mxu0 0.0
        %739 = vmatpush1.msra.mxu0 0.0
        %740 = vmatprep.subr.mxu0 0.0
        %741 = vmatpush1.msra.mxu0 0.0
        %742 = vmatprep.subr.mxu0 0.0
        %743 = vmatpush1.msra.mxu0 0.0
        %744 = vmatprep.subr.mxu0 0.0
        %745 = vmatpush1.msra.mxu0 0.0
        %746 = vmatprep.subr.mxu0 0.0
        %747 = vmatpush1.msra.mxu0 0.0
        %748 = vmatprep.subr.mxu0 0.0
        %749 = vmatpush1.msra.mxu0 0.0
        %750 = vmatprep.subr.mxu0 0.0
        %751 = vmatpush1.msra.mxu0 0.0
        %752 = vmatprep.subr.mxu0 0.0
        %753 = vmatpush1.msra.mxu0 0.0
        %754 = vmatprep.subr.mxu0 0.0
        %755 = vmatpush1.msra.mxu0 0.0
        %756 = vmatprep.subr.mxu0 0.0
        %757 = vmatpush1.msra.mxu0 0.0
        %758 = vmatprep.subr.mxu0 0.0
        %759 = vmatpush1.msra.mxu0 0.0
        %760 = vmatprep.subr.mxu0 0.0
        %761 = vmatpush1.msra.mxu0 0.0
        %762 = vmatprep.subr.mxu0 0.0
        %763 = vmatpush1.msra.mxu0 0.0
        %764 = vmatprep.subr.mxu0 0.0
        %765 = vmatpush1.msra.mxu0 0.0
        %766 = vmatprep.subr.mxu0 0.0
        %767 = vmatpush1.msra.mxu0 0.0
        %768 = vmatprep.subr.mxu0 0.0
        %769 = vmatpush1.msra.mxu0 0.0
        %770 = vmatprep.subr.mxu0 0.0
        %771 = vmatpush1.msra.mxu0 0.0
        %772 = vmatprep.subr.mxu0 0.0
        %773 = vmatpush1.msra.mxu0 0.0
        %774 = vmatprep.subr.mxu0 0.0
        %775 = vmatpush1.msra.mxu0 0.0
        %776 = vmatprep.subr.mxu0 0.0
        %777 = vmatpush1.msra.mxu0 0.0
        %778 = vmatprep.subr.mxu0 0.0
        %779 = vmatpush1.msra.mxu0 0.0
        %780 = vmatprep.subr.mxu0 0.0
        %781 = vmatpush1.msra.mxu0 0.0
        %782 = vmatprep.subr.mxu0 0.0
        %783 = vmatpush1.msra.mxu0 0.0
        %784 = vmatprep.subr.mxu0 0.0
        %785 = vmatpush1.msra.mxu0 0.0
        %786 = vmatprep.subr.mxu0 0.0
        %787 = vmatpush1.msra.mxu0 0.0
        %788 = vmatprep.subr.mxu0 0.0
        %789 = vmatpush1.msra.mxu0 0.0
        %790 = vmatprep.mubr.f32.mxu0 0.0
        %791 = vmatmul.mubr.f32.gmra.mrb[0].mxu0 %v724
        %v792 = vpop.f32.mrb[0].mxu0
        %v793 = vadd.f32 0.0, %v792
        %v794 = vpop.f32.mrb[0].mxu0
        %795 = vdwg.mxu0
        %v796 = vmul.f32 %v793, %v722
        %v797 = vld [vmem:[#allocation4] sm:$0xff]
        %s798 = scalar_lea.vmem %s7, %s628
        %v799 = vld [vmem:[%s798] sm:$0xff]
        %v801 = vsel %vm633, %v796, 0
        %803 = vmatprep.subr.mxu0 0.0
        %804 = vmatpush1.msra.mxu0 %v799
        %805 = vmatprep.subr.mxu0 0.0
        %806 = vmatpush1.msra.mxu0 0.0
        %807 = vmatprep.subr.mxu0 0.0
        %808 = vmatpush1.msra.mxu0 0.0
        %809 = vmatprep.subr.mxu0 0.0
        %810 = vmatpush1.msra.mxu0 0.0
        %811 = vmatprep.subr.mxu0 0.0
        %812 = vmatpush1.msra.mxu0 0.0
        %813 = vmatprep.subr.mxu0 0.0
        %814 = vmatpush1.msra.mxu0 0.0
        %815 = vmatprep.subr.mxu0 0.0
        %816 = vmatpush1.msra.mxu0 0.0
        %817 = vmatprep.subr.mxu0 0.0
        %818 = vmatpush1.msra.mxu0 0.0
        %819 = vmatprep.subr.mxu0 0.0
        %820 = vmatpush1.msra.mxu0 0.0
        %821 = vmatprep.subr.mxu0 0.0
        %822 = vmatpush1.msra.mxu0 0.0
        %823 = vmatprep.subr.mxu0 0.0
        %824 = vmatpush1.msra.mxu0 0.0
        %825 = vmatprep.subr.mxu0 0.0
        %826 = vmatpush1.msra.mxu0 0.0
        %827 = vmatprep.subr.mxu0 0.0
        %828 = vmatpush1.msra.mxu0 0.0
        %829 = vmatprep.subr.mxu0 0.0
        %830 = vmatpush1.msra.mxu0 0.0
        %831 = vmatprep.subr.mxu0 0.0
        %832 = vmatpush1.msra.mxu0 0.0
        %833 = vmatprep.subr.mxu0 0.0
        %834 = vmatpush1.msra.mxu0 0.0
        %835 = vmatprep.subr.mxu0 0.0
        %836 = vmatpush1.msra.mxu0 0.0
        %837 = vmatprep.subr.mxu0 0.0
        %838 = vmatpush1.msra.mxu0 0.0
        %839 = vmatprep.subr.mxu0 0.0
        %840 = vmatpush1.msra.mxu0 0.0
        %841 = vmatprep.subr.mxu0 0.0
        %842 = vmatpush1.msra.mxu0 0.0
        %843 = vmatprep.subr.mxu0 0.0
        %844 = vmatpush1.msra.mxu0 0.0
        %845 = vmatprep.subr.mxu0 0.0
        %846 = vmatpush1.msra.mxu0 0.0
        %847 = vmatprep.subr.mxu0 0.0
        %848 = vmatpush1.msra.mxu0 0.0
        %849 = vmatprep.subr.mxu0 0.0
        %850 = vmatpush1.msra.mxu0 0.0
        %851 = vmatprep.subr.mxu0 0.0
        %852 = vmatpush1.msra.mxu0 0.0
        %853 = vmatprep.subr.mxu0 0.0
        %854 = vmatpush1.msra.mxu0 0.0
        %855 = vmatprep.subr.mxu0 0.0
        %856 = vmatpush1.msra.mxu0 0.0
        %857 = vmatprep.subr.mxu0 0.0
        %858 = vmatpush1.msra.mxu0 0.0
        %859 = vmatprep.subr.mxu0 0.0
        %860 = vmatpush1.msra.mxu0 0.0
        %861 = vmatprep.subr.mxu0 0.0
        %862 = vmatpush1.msra.mxu0 0.0
        %863 = vmatprep.subr.mxu0 0.0
        %864 = vmatpush1.msra.mxu0 0.0
        %865 = vmatprep.subr.mxu0 0.0
        %866 = vmatpush1.msra.mxu0 0.0
        %867 = vmatprep.mubr.f32.mxu0 0.0
        %868 = vmatmul.mubr.f32.gmra.mrb[0].mxu0 %v801
        %v869 = vpop.f32.mrb[0].mxu0
        %v870 = vadd.f32 0.0, %v869
        %v871 = vpop.f32.mrb[0].mxu0
        %872 = vdwg.mxu0
        %v873 = vadd.f32 %v797, %v870
        %874 = vst.msk [vmem:[#allocation4] sm:$0xff] %vm554, %v873
        %p875 = scmp.eq.s32.totalorder %s30, 3
        // Predicated region
        $region65: #{tpu_custom_call.1} parent=55 // pred_check
          %p876 = pneg %p875
        $region66: #{tpu_custom_call.1} parent=55 // pred_check_branch
          %878 = sbr.rel (%p876) target = $region68
        $region67: #{tpu_custom_call.1} parent=55 // pred_region
          %v879 = vld [vmem:[#allocation4] sm:$0xff]
          %v880 = vld [vmem:[%s8] sm:$0x1]
          %v882 = vlaneseq
          %v883 = vshrl.u32 %v882, 7
          %v884 = vsub.s32 0, %v883
          %v885 = vrot.slane %v880, %v884
          %v887 = vadd.f32 %v879, %v885
          %888 = vst.msk [vmem:[%s344] sm:$0xff] %vm554, %v887
        $region68: #{tpu_custom_call.1} parent=55 // pred_fallthru
          _
        %s889 = sand.u32 %s246, 1
        %s890 = scalar_lea.sflag [#allocation6], %s889
        %s891 = sand.u32 %s246, 1
        %s892 = smul.addr %s891, 8
        %s893 = scalar_lea.vmem [#allocation5], %s892
        // Predicated region
        $region69: #{tpu_custom_call.1} parent=55 // pred_check
          %p894 = pneg %p256
        $region70: #{tpu_custom_call.1} parent=55 // pred_check_branch
          %896 = sbr.rel (%p894) target = $region72
        $region71: #{tpu_custom_call.1} parent=55 // pred_region
          %s898 = ssub.s32 128, 128
          %899 = vsyncadd %s890, %s898
          %s900 = sadd.s32 %s29, %s28
          %s901 = smul.addr %s900, 128
          %s902 = scalar_lea.hbm %s9, %s901
          %s904 = sshll.u32 %s893, 4
          %s905 = int_to_ptr.vmem [resolvable:$true] %s904
          %907 = dma.vmem_to_hbm [thread:$0]  %s905, 128, %s902, %s890
        $region72: #{tpu_custom_call.1} parent=55 // pred_fallthru
          _
      $region56: #{tpu_custom_call.1} parent=5 // pred_fallthru
        _
      %p908 = scmp.le.s32.totalorder 2, %s18
      // Predicated region
      $region73: #{tpu_custom_call.1} parent=5 // pred_check
        %p909 = pneg %p908
      $region74: #{tpu_custom_call.1} parent=5 // pred_check_branch
        %911 = sbr.rel (%p909) target = $region76
      $region75: #{tpu_custom_call.1} parent=5 // pred_region
        %s912 = ssub.s32 %s18, 2
        // Predicated region
        $region77: #{tpu_custom_call.1} parent=75 // pred_check
          %p913 = pneg %p262
        $region78: #{tpu_custom_call.1} parent=75 // pred_check_branch
          %915 = sbr.rel (%p913) target = $region80
        $region79: #{tpu_custom_call.1} parent=75 // pred_region
          %s916 = sand.u32 %s247, 1
          %s917 = scalar_lea.sflag [#allocation6], %s916
          %s918 = sand.u32 %s247, 1
          %s919 = smul.addr %s918, 8
          %s920 = scalar_lea.vmem [#allocation5], %s919
          %921 = dma.done %s917, 128
        $region80: #{tpu_custom_call.1} parent=75 // pred_fallthru
          _
      $region76: #{tpu_custom_call.1} parent=5 // pred_fallthru
        _
    $region6: #{tpu_custom_call.1} parent=1 // loop_footer
      %s22 = sadd.s32 1, %s18
    $region7: #{tpu_custom_call.1} parent=1 // loop_footer_branch
      %17 = sbr.rel target = $region3
    $region8: #{tpu_custom_call.1} parent=1 // loop_exit
      _
    %922 = vsyncpa [#allocation6], 1
    %s923 = scalar_lea.sflag [#allocation6], 1
    %924 = vsyncpa %s923, 1

</llo_original>
